<compile_context>
chip_gen: v5e
topology: v5e:2x2
jax: 0.10.0
libtpu: 0.0.40
codegen_flags: <defaults>
</compile_context>

<pallas_src>
import functools
import math

import jax
import jax.numpy as jnp
from jax.experimental import pallas as pl
from jax.experimental.pallas import tpu as pltpu


# ---------------------------------------------------------------------------
# Hardware-derived budgets & heuristics.
# ---------------------------------------------------------------------------

@functools.lru_cache(maxsize=1)
def _device_kind() -> str:
    try:
        return jax.devices()[0].device_kind.lower()
    except Exception:
        return ""


@functools.lru_cache(maxsize=1)
def _vmem_info():
    """(streaming budget, default vmem_limit_bytes, physical capacity)."""
    try:
        cap = int(pltpu.get_tpu_info().vmem_capacity_bytes)
    except Exception:
        cap = 64 * 1024 * 1024  # conservative (v7x-sized) fallback
    if cap >= 100 * 1024 * 1024:   # v5e / v6e: 128 MiB physical per core
        return 64 * 1024 * 1024, 100 * 1024 * 1024, cap
    # v7x: 64 MiB physical per TensorCore
    return 24 * 1024 * 1024, 48 * 1024 * 1024, cap


def _fuse_max_dim(compute_dtype) -> int:
    """Max fused nb*d_in / nb*d_out; dense matmul wastes ~nb x FLOPs."""
    kind = _device_kind()
    if "v5" in kind:
        # v5e MXU is 4x128^2 and much slower in f32: only fuse wide blocks
        # when operands are bf16, otherwise stay small.
        return 512 if jnp.dtype(compute_dtype).itemsize <= 2 else 256
    if "v6" in kind or "v7" in kind:
        # 256-wide MXU + high HBM BW: wasted FLOPs stay hidden under the
        # x/out DMA stream up to ~1024.
        return 1024
    return 512


def _should_fuse(nb, d_in, d_out, compute_dtype) -> bool:
    lim = _fuse_max_dim(compute_dtype)
    return (nb * d_in <= lim) and (nb * d_out <= lim)


def _round_up(x: int, mult: int) -> int:
    return ((x + mult - 1) // mult) * mult


def _min_tile_m(*dtypes) -> int:
    """Sublane-packing floor for the second-to-last block dim."""
    itemsize = min(jnp.dtype(d).itemsize for d in dtypes)
    return max(8, 32 // max(1, itemsize))


def _choose_tile_m(m, stream_bytes_per_row, resident_bytes, budget, min_tile):
    """Largest M tile whose pipelined buffers fit the VMEM budget."""
    tile = 1024
    while tile > min_tile and tile * stream_bytes_per_row + resident_bytes > budget:
        tile //= 2
    tile = max(tile, min_tile)
    if m <= tile:
        return m                      # full dim is always layout-legal
    # v7x has 2 TensorCores; make sure the "parallel" M axis has >= 2 steps.
    if "v7" in _device_kind() and m >= 512:
        half = _round_up(pl.cdiv(m, 2), min_tile)
        tile = min(tile, max(256, half))
    return max(min_tile, (tile // min_tile) * min_tile)


def build_block_diagonal_weight(w, dtype=None):
    """(nb, d_in, d_out) -> dense block-diagonal (nb*d_in, nb*d_out)."""
    nb, d_in, d_out = w.shape
    if dtype is not None:
        w = w.astype(dtype)
    eye = jnp.eye(nb, dtype=w.dtype)
    return jnp.einsum("hij,hg->higj", w, eye).reshape(nb * d_in, nb * d_out)


# ---------------------------------------------------------------------------
# Kernels.
# ---------------------------------------------------------------------------

def _fused_kernel(x_ref, w_ref, b_ref, o_ref):
    # x_ref: (TILE_M, nb*d_in); w_ref: (nb*d_in, nb*d_out) block-diagonal
    # (resident); b_ref: (1, nb*d_out) f32.  One lane-dense MXU matmul.
    acc = jnp.dot(x_ref[...], w_ref[...], preferred_element_type=jnp.float32)
    o_ref[...] = (acc + b_ref[...]).astype(o_ref.dtype)


def _per_head_kernel(x_ref, w_ref, b_ref, o_ref):
    # Head lives on the grid.  x_ref: (TILE_M, d_in) lane-dense column slab of
    # the (M, nb*d_in) view; w_ref: (1, d_in, d_out) (resident per head);
    # b_ref: (1, 1, d_out) f32; o_ref: (TILE_M, d_out) lane-dense.
    acc = jnp.dot(x_ref[...], w_ref[0], preferred_element_type=jnp.float32)
    o_ref[...] = (acc + b_ref[0]).astype(o_ref.dtype)


def _per_head_3d_kernel(x_ref, w_ref, b_ref, o_ref):
    # Layout fallback when d_in/d_out are not multiples of 128.
    # x_ref: (TILE_M, nb, d_in), w_ref: (nb, d_in, d_out), b_ref: (nb, 1, d_out).
    nb = w_ref.shape[0]
    # TODO(synk): for very large nb switch to lax.fori_loop to bound vreg live
    # ranges; static unroll is fine for Griffin-sized nb (<= 16).
    for h in range(nb):
        acc = jnp.dot(x_ref[:, h, :], w_ref[h],
                      preferred_element_type=jnp.float32)
        o_ref[:, h, :] = (acc + b_ref[h]).astype(o_ref.dtype)


# ---------------------------------------------------------------------------
# Wrapper.
# ---------------------------------------------------------------------------

@functools.partial(jax.jit, static_argnames=("compute_dtype",))
def block_diagonal_einsum(x, w, b, w_dense=None, *, compute_dtype=None):
    """einsum('...hi,hij->...hj', x, w) + b via Pallas TPU kernels.

    Args:
      x: (..., num_blocks, d_in)
      w: (num_blocks, d_in, d_out)
      b: (num_blocks, d_out)
      w_dense: optional pre-built dense block-diagonal weight (cached by the
        Einsum module so it is not rebuilt in HBM every call).
      compute_dtype: optional matmul-operand dtype. Default: bf16 if x is
        bf16, otherwise f32 (reference semantics). Accumulation and the bias
        add are always f32.
    Returns:
      (..., num_blocks, d_out), dtype of x.
    """
    *lead, nb_x, d_in_x = x.shape
    nb, d_in, d_out = w.shape
    if (nb_x, d_in_x) != (nb, d_in):
        raise ValueError(
            f"x trailing dims {(nb_x, d_in_x)} do not match w blocks {(nb, d_in)}.")
    if tuple(b.shape) != (nb, d_out):
        raise ValueError(f"bias shape {b.shape} != {(nb, d_out)}.")

    out_dtype = x.dtype
    if compute_dtype is None:
        # Never upcast bf16 inputs; keep f32 inputs f32 (reference numerics).
        compute_dtype = jnp.bfloat16 if x.dtype == jnp.bfloat16 else jnp.float32
    compute_dtype = jnp.dtype(compute_dtype)
    x = x.astype(compute_dtype)
    w = w.astype(compute_dtype)

    m = int(math.prod(lead)) if lead else 1
    x_bytes = compute_dtype.itemsize
    o_bytes = jnp.dtype(out_dtype).itemsize
    min_tile = _min_tile_m(compute_dtype, out_dtype)
    budget, vmem_limit, vmem_cap = _vmem_info()
    vmem_cap_use = int(vmem_cap * 0.92)

    fuse = _should_fuse(nb, d_in, d_out, compute_dtype)
    lane_ok = (d_in % 128 == 0) and (d_out % 128 == 0)

    b_f32 = b.astype(jnp.float32)

    # ----------------------------- fused path ------------------------------
    if fuse:
        k, n = nb * d_in, nb * d_out
        # Per-row streaming bytes: double-buffered x + out tiles + f32 acc.
        stream_row = 2 * k * x_bytes + 2 * n * o_bytes + n * 4
        resident = 2 * (k * n * x_bytes + n * 4)   # pipeline double-buffers
        tile_m = _choose_tile_m(m, stream_row, resident, budget, min_tile)
        grid_m = pl.cdiv(m, tile_m)
        need = tile_m * stream_row + resident

        if w_dense is None:
            w_dense = build_block_diagonal_weight(w)
        else:
            w_dense = w_dense.astype(compute_dtype)

        x2 = x.reshape(m, k)                         # free reshape
        b2 = b_f32.reshape(1, n)

        cparams = pltpu.CompilerParams(
            dimension_semantics=("parallel",),
            vmem_limit_bytes=min(vmem_cap_use,
                                 max(vmem_limit, need + (4 << 20))),
        )
        cost = pl.CostEstimate(
            flops=2 * m * k * n,
            transcendentals=0,
            bytes_accessed=(m * k * x_bytes + k * n * x_bytes + n * 4
                            + m * n * o_bytes),
        )
        out2 = pl.pallas_call(
            _fused_kernel,
            out_shape=jax.ShapeDtypeStruct((m, n), out_dtype),
            grid_spec=pltpu.PrefetchScalarGridSpec(
                num_scalar_prefetch=0,
                grid=(grid_m,),
                in_specs=[
                    pl.BlockSpec((tile_m, k), lambda mi: (mi, 0)),
                    pl.BlockSpec((k, n), lambda mi: (0, 0)),      # resident
                    pl.BlockSpec((1, n), lambda mi: (0, 0)),      # resident
                ],
                out_specs=pl.BlockSpec((tile_m, n), lambda mi: (mi, 0)),
            ),
            compiler_params=cparams,
            cost_estimate=cost,
        )(x2, w_dense, b2)
        return out2.reshape(*lead, nb, d_out)

    cost = pl.CostEstimate(
        flops=2 * m * nb * d_in * d_out,
        transcendentals=0,
        bytes_accessed=(m * nb * d_in * x_bytes + nb * d_in * d_out * x_bytes
                        + nb * d_out * 4 + m * nb * d_out * o_bytes),
    )
    b3 = b_f32.reshape(nb, 1, d_out)

    # --------------------- per-head path (head on grid) --------------------
    if lane_ok:
        stream_row = 2 * d_in * x_bytes + 2 * d_out * o_bytes + d_out * 4
        resident = 2 * (d_in * d_out * x_bytes + d_out * 4)
        tile_m = _choose_tile_m(m, stream_row, resident, budget, min_tile)
        grid_m = pl.cdiv(m, tile_m)
        need = tile_m * stream_row + resident

        x2 = x.reshape(m, nb * d_in)                 # free reshape
        cparams = pltpu.CompilerParams(
            # head outer (weight stays resident across the M sweep),
            # M inner + parallel so v7x's two TensorCores both get work.
            dimension_semantics=("arbitrary", "parallel"),
            vmem_limit_bytes=min(vmem_cap_use,
                                 max(vmem_limit, need + (4 << 20))),
        )
        out2 = pl.pallas_call(
            _per_head_kernel,
            out_shape=jax.ShapeDtypeStruct((m, nb * d_out), out_dtype),
            grid_spec=pltpu.PrefetchScalarGridSpec(
                num_scalar_prefetch=0,
                grid=(nb, grid_m),
                in_specs=[
                    pl.BlockSpec((tile_m, d_in), lambda h, mi: (mi, h)),
                    pl.BlockSpec((1, d_in, d_out), lambda h, mi: (h, 0, 0)),
                    pl.BlockSpec((1, 1, d_out), lambda h, mi: (h, 0, 0)),
                ],
                out_specs=pl.BlockSpec((tile_m, d_out), lambda h, mi: (mi, h)),
            ),
            compiler_params=cparams,
            cost_estimate=cost,
        )(x2, w, b3)
        return out2.reshape(*lead, nb, d_out)

    # ------------- 3D layout fallback (d_in/d_out not 128-aligned) ---------
    stream_row = 2 * nb * d_in * x_bytes + 2 * nb * d_out * o_bytes + nb * d_out * 4
    resident = 2 * (nb * d_in * d_out * x_bytes + nb * d_out * 4)
    tile_m = _choose_tile_m(m, stream_row, resident, budget, min_tile)
    grid_m = pl.cdiv(m, tile_m)
    need = tile_m * stream_row + resident

    x3 = x.reshape(m, nb, d_in)                      # free reshape
    cparams = pltpu.CompilerParams(
        dimension_semantics=("parallel",),
        vmem_limit_bytes=min(vmem_cap_use, max(vmem_limit, need + (4 << 20))),
    )
    out3 = pl.pallas_call(
        _per_head_3d_kernel,
        out_shape=jax.ShapeDtypeStruct((m, nb, d_out), out_dtype),
        grid_spec=pltpu.PrefetchScalarGridSpec(
            num_scalar_prefetch=0,
            grid=(grid_m,),
            in_specs=[
                pl.BlockSpec((tile_m, nb, d_in), lambda mi: (mi, 0, 0)),
                pl.BlockSpec((nb, d_in, d_out), lambda mi: (0, 0, 0)),  # resident
                pl.BlockSpec((nb, 1, d_out), lambda mi: (0, 0, 0)),     # resident
            ],
            out_specs=pl.BlockSpec((tile_m, nb, d_out), lambda mi: (mi, 0, 0)),
        ),
        compiler_params=cparams,
        cost_estimate=cost,
    )(x3, w, b3)
    return out3.reshape(*lead, nb, d_out)


class Einsum:
    """JAX/Pallas port of the PyTorch Einsum module (block-diagonal eqn only)."""

    def __init__(self, w_shape, b_shape, eqn, w_init_variance_scale=1.0,
                 dtype=jnp.float32, key=None, compute_dtype=None):
        if eqn.replace(" ", "") != "...hi,hij->...hj":
            # TODO(synk): general einsum equations are not implemented in this port.
            raise NotImplementedError(
                "This Pallas port implements only the block-diagonal einsum "
                "'... h i, h i j -> ... h j' used by Griffin's BlockDiagonalLinear.")
        w_shape = tuple(w_shape)
        b_shape = tuple(b_shape)
        if len(w_shape) != 3 or b_shape != (w_shape[0], w_shape[2]):
            raise ValueError(f"Inconsistent w_shape={w_shape} / b_shape={b_shape}.")
        self.w_shape = w_shape
        self.b_shape = b_shape
        self.eqn = eqn
        self.compute_dtype = compute_dtype
        if key is None:
            key = jax.random.PRNGKey(0)
        std = math.sqrt(w_init_variance_scale / self.w_shape[1])
        self.w = (std * jax.random.normal(key, self.w_shape)).astype(dtype)
        self.b = jnp.zeros(self.b_shape, dtype=dtype)

        # Pre-build (and cache) the dense block-diagonal weight for the fused
        # path so it isn't re-materialized in HBM on every call.
        nb, d_in, d_out = self.w_shape
        cd = compute_dtype
        if cd is None:
            cd = jnp.bfloat16 if jnp.dtype(dtype) == jnp.bfloat16 else jnp.float32
        self._w_dense = None
        if _should_fuse(nb, d_in, d_out, cd):
            self._w_dense = build_block_diagonal_weight(self.w, dtype=cd)

    def __call__(self, x):
        return block_diagonal_einsum(x, self.w, self.b, w_dense=self._w_dense,
                                     compute_dtype=self.compute_dtype)


if __name__ == "__main__":
    key = jax.random.PRNGKey(0)
    k1, k2, k3, k4, k5, k6 = jax.random.split(key, 6)

    # --- Case 1: small Griffin-like blocks -> fused lane-dense path. ---
    batch, seq, num_blocks, width = 2, 8, 4, 32
    x = jax.random.normal(k1, (batch, seq, num_blocks, width), dtype=jnp.float32)
    module = Einsum(
        w_shape=(num_blocks, width, width),
        b_shape=(num_blocks, width),
        eqn="... h i, h i j -> ... h j",
        w_init_variance_scale=1.0,
        key=k2,
    )
    out = jax.block_until_ready(module(x))
    ref = jnp.einsum("...hi,hij->...hj", x, module.w,
                     precision=jax.lax.Precision.HIGHEST) + module.b
    assert out.shape == (batch, seq, num_blocks, width)
    assert jnp.allclose(out, ref, atol=1e-5, rtol=1e-5)

    # --- Case 2: large 128-aligned blocks -> head-on-grid per-head path. ---
    b2_, s2_, nb2_, d2_ = 2, 4, 4, 512
    x2 = jax.random.normal(k3, (b2_, s2_, nb2_, d2_), dtype=jnp.float32)
    module2 = Einsum(
        w_shape=(nb2_, d2_, d2_),
        b_shape=(nb2_, d2_),
        eqn="... h i, h i j -> ... h j",
        w_init_variance_scale=1.0,
        key=k4,
    )
    out2 = jax.block_until_ready(module2(x2))
    ref2 = jnp.einsum("...hi,hij->...hj", x2, module2.w,
                      precision=jax.lax.Precision.HIGHEST) + module2.b
    assert out2.shape == (b2_, s2_, nb2_, d2_)
    assert jnp.allclose(out2, ref2, atol=2e-3, rtol=2e-3)

    # --- Case 3: large non-128-aligned blocks -> 3D layout-fallback path. ---
    b3_, s3_, nb3_, d3_ = 2, 4, 8, 192
    x3 = jax.random.normal(k5, (b3_, s3_, nb3_, d3_), dtype=jnp.float32)
    module3 = Einsum(
        w_shape=(nb3_, d3_, d3_),
        b_shape=(nb3_, d3_),
        eqn="... h i, h i j -> ... h j",
        w_init_variance_scale=1.0,
        key=k6,
    )
    out3 = jax.block_until_ready(module3(x3))
    ref3 = jnp.einsum("...hi,hij->...hj", x3, module3.w,
                      precision=jax.lax.Precision.HIGHEST) + module3.b
    assert out3.shape == (b3_, s3_, nb3_, d3_)
    assert jnp.allclose(out3, ref3, atol=2e-3, rtol=2e-3)

    print("KERNEL_OK")
</pallas_src>

<mosaic_0001>
module attributes {stable_mosaic.version = 11 : i64} {
  func.func @_fused_kernel(%arg0: i32, %arg1: memref<16x128xf32, #tpu.memory_space<vmem>>, %arg2: memref<128x128xf32, #tpu.memory_space<vmem>>, %arg3: memref<1x128xf32, #tpu.memory_space<vmem>>, %arg4: memref<16x128xf32, #tpu.memory_space<vmem>>) attributes {dimension_semantics = [#tpu.dimension_semantics<parallel>], iteration_bounds = array<i64: 1>, scalar_prefetch = 0 : i64, scratch_operands = 0 : i64, tpu.core_type = #tpu.core_type<tc>, window_params = [{transform_indices = @transform_0, window_bounds = array<i64: 16, 128>}, {pipeline_mode = #tpu.pipeline_mode<synchronous>, transform_indices = @transform_1, window_bounds = array<i64: 128, 128>}, {pipeline_mode = #tpu.pipeline_mode<synchronous>, transform_indices = @transform_2, window_bounds = array<i64: 1, 128>}, {transform_indices = @transform_3, window_bounds = array<i64: 16, 128>}]} {
    %c0 = arith.constant 0 : index
    %c0_0 = arith.constant 0 : index
    %0 = vector.load %arg1[%c0, %c0_0] : memref<16x128xf32, #tpu.memory_space<vmem>>, vector<16x128xf32>
    %c0_1 = arith.constant 0 : index
    %c0_2 = arith.constant 0 : index
    %1 = vector.load %arg2[%c0_1, %c0_2] : memref<128x128xf32, #tpu.memory_space<vmem>>, vector<128x128xf32>
    %cst = arith.constant dense<0.000000e+00> : vector<16x128xf32>
    %2 = tpu.matmul %0, %1, %cst {dimension_numbers = #tpu.dot_dimension_numbers<[1], [0], [0], [1], [0, 0, 1, 1], [], []>} : vector<16x128xf32>, vector<128x128xf32>, vector<16x128xf32> -> vector<16x128xf32>
    %c0_3 = arith.constant 0 : index
    %c0_4 = arith.constant 0 : index
    %3 = vector.load %arg3[%c0_3, %c0_4] : memref<1x128xf32, #tpu.memory_space<vmem>>, vector<1x128xf32>
    %4 = vector.broadcast %3 : vector<1x128xf32> to vector<16x128xf32>
    %5 = arith.addf %2, %4 : vector<16x128xf32>
    %c0_5 = arith.constant 0 : index
    %c0_6 = arith.constant 0 : index
    %6 = vector.load %arg4[%c0_5, %c0_6] : memref<16x128xf32, #tpu.memory_space<vmem>>, vector<16x128xf32>
    tpu.vector_store %arg4[%c0_5, %c0_6], %5 {strides = array<i32>} : memref<16x128xf32, #tpu.memory_space<vmem>>, vector<16x128xf32>,
    return
  }
  func.func @transform_0(%arg0: i32) -> (i32, i32) {
    %c0_i32 = arith.constant 0 : i32
    %c0_i32_0 = arith.constant 0 : i32
    return %arg0, %c0_i32 : i32, i32
  }
  func.func @transform_1(%arg0: i32) -> (i32, i32) {
    %c0_i32 = arith.constant 0 : i32
    %c0_i32_0 = arith.constant 0 : i32
    %c0_i32_1 = arith.constant 0 : i32
    return %c0_i32, %c0_i32_0 : i32, i32
  }
  func.func @transform_2(%arg0: i32) -> (i32, i32) {
    %c0_i32 = arith.constant 0 : i32
    %c0_i32_0 = arith.constant 0 : i32
    %c0_i32_1 = arith.constant 0 : i32
    return %c0_i32, %c0_i32_0 : i32, i32
  }
  func.func @transform_3(%arg0: i32) -> (i32, i32) {
    %c0_i32 = arith.constant 0 : i32
    %c0_i32_0 = arith.constant 0 : i32
    return %arg0, %c0_i32 : i32, i32
  }
}

</mosaic_0001>

<llo_original>
// kernel: block_diagonal_einsum.1
$region0: #{block_diagonal_einsum.1}
  #allocation0 [shape = 'u32[]', space=smem, size = 0x4, offset = 0x4, fixed_abs, tag = 'smem constant byte address 0x4 - core index']
  #allocation1 [shape = 'u32[72,128]{1,0:T(1,128)}', space=vmem, size = 0x9000, scoped, tag = 'internal scratch']
  %s0 = inlined_call_operand.vmem [shape: f32[16,128], index: 0, kind: input, shape index: {}]
  %s1 = inlined_call_operand.hbm [shape: f32[128,128], index: 1, kind: input, shape index: {}]
  %s2 = inlined_call_operand.vmem [shape: f32[1,128], index: 2, kind: input, shape index: {}]
  %s3 = inlined_call_operand.vmem [shape: f32[16,128], index: 3, kind: output, shape index: {}]
  %s4 = sld [smem:[#allocation0]]
  $region26: #{block_diagonal_einsum.1} parent=0
    _
  %s6 = ssub.s32 1, %s4
  %s7 = scalar_select 0, %s6, %s4
  $region1: #{block_diagonal_einsum.1} parent=0
    #allocation2 [shape = 'u8[65536]{0}', space=vmem, size = 0x10000, scoped, tag = 'input window, operand 1, single buffered']
    #allocation3 [shape = 's32[1]{0}', space=sflag, size = 0x4, scoped, tag = 'scoped memory for block_diagonal_einsum.1']
    %8 = vsyncpa [#allocation3], 0
    // Predicated region
    $region2: #{block_diagonal_einsum.1} parent=1 // pred_check
      _
    $region3: #{block_diagonal_einsum.1} parent=1 // pred_check_branch
      %10 = sbr.rel (0) target = $region5
    $region4: #{block_diagonal_einsum.1} parent=1 // pred_region
      _
    $region5: #{block_diagonal_einsum.1} parent=1 // pred_fallthru
      _
    // Predicated region
    $region6: #{block_diagonal_einsum.1} parent=1 // pred_check
      _
    $region7: #{block_diagonal_einsum.1} parent=1 // pred_check_branch
      %12 = sbr.rel (0) target = $region9
    $region8: #{block_diagonal_einsum.1} parent=1 // pred_region
      %14 = vsyncadd [#allocation3], 0
      %s15 = sshll.u32 %s1, 4
      %s16 = int_to_ptr.hbm [resolvable:$true] %s15
      %s17 = sshll.u32 [#allocation2], 4
      %s18 = int_to_ptr.vmem [resolvable:$true] %s17
      %23 = dma.hbm_to_vmem [thread:$0]  %s16, 2048, %s18, [#allocation3], 128, 128, 8
    $region9: #{block_diagonal_einsum.1} parent=1 // pred_fallthru
      _
    // Predicated region
    $region10: #{block_diagonal_einsum.1} parent=1 // pred_check
      _
    $region11: #{block_diagonal_einsum.1} parent=1 // pred_check_branch
      %25 = sbr.rel (0) target = $region13
    $region12: #{block_diagonal_einsum.1} parent=1 // pred_region
      _
    $region13: #{block_diagonal_einsum.1} parent=1 // pred_fallthru
      _
    // Predicated region
    $region14: #{block_diagonal_einsum.1} parent=1 // pred_check
      _
    $region15: #{block_diagonal_einsum.1} parent=1 // pred_check_branch
      %27 = sbr.rel (0) target = $region17
    $region16: #{block_diagonal_einsum.1} parent=1 // pred_region
      %29 = dma.done [#allocation3], 2048
    $region17: #{block_diagonal_einsum.1} parent=1 // pred_fallthru
      _
    %v30 = vld [vmem:[%s0] sm:$0xff]
    %v31 = vld [vmem:[%s0 + $0x8] sm:$0xff]
    %v32 = vld [vmem:[#allocation2] sm:$0xff]
    %v33 = vld [vmem:[#allocation2 + $0x8] sm:$0xff]
    %v34 = vld [vmem:[#allocation2 + $0x10] sm:$0xff]
    %v35 = vld [vmem:[#allocation2 + $0x18] sm:$0xff]
    %v36 = vld [vmem:[#allocation2 + $0x20] sm:$0xff]
    %v37 = vld [vmem:[#allocation2 + $0x28] sm:$0xff]
    %v38 = vld [vmem:[#allocation2 + $0x30] sm:$0xff]
    %v39 = vld [vmem:[#allocation2 + $0x38] sm:$0xff]
    %v40 = vld [vmem:[#allocation2 + $0x40] sm:$0xff]
    %v41 = vld [vmem:[#allocation2 + $0x48] sm:$0xff]
    %v42 = vld [vmem:[#allocation2 + $0x50] sm:$0xff]
    %v43 = vld [vmem:[#allocation2 + $0x58] sm:$0xff]
    %v44 = vld [vmem:[#allocation2 + $0x60] sm:$0xff]
    %v45 = vld [vmem:[#allocation2 + $0x68] sm:$0xff]
    %v46 = vld [vmem:[#allocation2 + $0x70] sm:$0xff]
    %v47 = vld [vmem:[#allocation2 + $0x78] sm:$0xff]
    %v48 = vld [vmem:[%s2] sm:$0x1]
    %v50 = vperm.slane %v48, 0
    %52 = vmatpush.msra.mxu0 %v47
    %53 = vmatpush.msra.mxu0 %v46
    %54 = vmatpush.msra.mxu0 %v45
    %55 = vmatpush.msra.mxu0 %v44
    %56 = vmatpush.msra.mxu0 %v43
    %57 = vmatpush.msra.mxu0 %v42
    %58 = vmatpush.msra.mxu0 %v41
    %59 = vmatpush.msra.mxu0 %v40
    %60 = vmatpush.msra.mxu0 %v39
    %61 = vmatpush.msra.mxu0 %v38
    %62 = vmatpush.msra.mxu0 %v37
    %63 = vmatpush.msra.mxu0 %v36
    %64 = vmatpush.msra.mxu0 %v35
    %65 = vmatpush.msra.mxu0 %v34
    %66 = vmatpush.msra.mxu0 %v33
    %67 = vmatpush.msra.mxu0 %v32
    %68 = vmatmul.f32.gmra.mxu0 %v30
    %v69 = vpop.f32.mrf.mxu0
    %v70 = vadd.f32 %v50, %v69
    %71 = vmatmul.f32.gmra.mxu0 %v31
    %v72 = vpop.f32.mrf.mxu0
    %v73 = vadd.f32 %v50, %v72
    %74 = vdwg.mxu0
    %75 = vst [vmem:[%s3] sm:$0xff] %v70
    %76 = vst [vmem:[%s3 + $0x8] sm:$0xff] %v73
    // Predicated region
    $region18: #{block_diagonal_einsum.1} parent=1 // pred_check
      _
    $region19: #{block_diagonal_einsum.1} parent=1 // pred_check_branch
      %78 = sbr.rel (0) target = $region21
    $region20: #{block_diagonal_einsum.1} parent=1 // pred_region
      _
    $region21: #{block_diagonal_einsum.1} parent=1 // pred_fallthru
      _
    // Predicated region
    $region22: #{block_diagonal_einsum.1} parent=1 // pred_check
      _
    $region23: #{block_diagonal_einsum.1} parent=1 // pred_check_branch
      %80 = sbr.rel (0) target = $region25
    $region24: #{block_diagonal_einsum.1} parent=1 // pred_region
      _
    $region25: #{block_diagonal_einsum.1} parent=1 // pred_fallthru
      _
    %81 = vsyncpa [#allocation3], 1

</llo_original>
